<compile_context>
chip_gen: v7x
topology: tpu7x:2x2x1
jax: 0.10.0
libtpu: 0.0.40
codegen_flags: <defaults>
</compile_context>

<pallas_src>
import jax
import jax.numpy as jnp
import numpy as np
from jax.experimental import pallas as pl
from jax.experimental.pallas import tpu as pltpu


def _parallel_sum_kernel(x_ref, wct_ref, wh_ref, ww_ref, bias_ref, o_ref):
    TB, H, W, C = x_ref.shape
    f32 = jnp.float32

    x = x_ref[...]                      # (TB, H, W, C)
    wct = wct_ref[...]                  # (C, C)  == Wc^T (in, out)
    wh = wh_ref[...]                    # (H, H)  torch Linear weight (out, in)
    ww = ww_ref[...]                    # (W, W)
    bias = bias_ref[...].astype(f32)    # (H, W, C) combined bc + bh + bw

    # ---- Branch 3: width mixing, block-wide ------------------------------
    # (TB,H,W,C) -> (TB*H, W, C) only merges leading dims (layout preserving);
    # one contraction over the sublane axis W for the whole block.
    x3 = x.reshape(TB * H, W, C)
    y3 = jnp.einsum('nwc,gw->ngc', x3, ww,
                    preferred_element_type=f32).reshape(TB, H, W, C)

    # ---- Branch 1: channel mixing (dominant FLOPs), block-wide -----------
    # (TB*H*W, C) @ (C, C) is one clean 2-D MXU matmul; the flatten is a pure
    # vreg relabeling when W % 8 == 0.
    if W % 8 == 0:
        y1 = jnp.dot(x.reshape(TB * H * W, C), wct,
                     preferred_element_type=f32).reshape(TB, H, W, C)
        acc = y1 + y3 + bias            # bias broadcasts over the batch dim
    else:
        acc = y3 + bias

    # ---- Branch 2: height mixing (+ branch-1 fallback), per image --------
    # TB is small (<= 8); static unroll keeps the proven rank-3 contraction
    # form and gives the LLO scheduler full visibility.
    for b in range(TB):
        xb = x[b]                       # (H, W, C)
        a = acc[b] + jnp.einsum('hwc,gh->gwc', xb, wh,
                                preferred_element_type=f32)
        if W % 8 != 0:
            a = a + jnp.einsum('hwc,cd->hwd', xb, wct,
                               preferred_element_type=f32)
        o_ref[b] = a.astype(o_ref.dtype)


def _pick_block_batch(B, per_batch_bytes, target_bytes=1 << 20, max_tb=8):
    """Largest divisor of B giving ~target-sized blocks, keeping >= 2 grid steps."""
    cap = max(1, min(max_tb, target_bytes // max(1, per_batch_bytes)))
    divisors = [d for d in range(1, B + 1) if B % d == 0]
    fits = [d for d in divisors if d <= cap] or [1]
    tb = max(fits)
    if B // tb < 2:                     # leave work for both v7x TensorCores
        two_plus = [d for d in fits if B // d >= 2]
        if two_plus:
            tb = max(two_plus)
    return tb


def parallel_sum(x, wc, bc, wh, bh, ww, bw, *, block_batch=None):
    """sum of: Linear(C) over channels, Linear(H) over height, Linear(W) over width.

    x: (B, H, W, C); wc: (C, C); bc: (C,); wh: (H, H); bh: (H,); ww: (W, W); bw: (W,).
    Weights follow torch.nn.Linear convention (out_features, in_features).
    """
    B, H, W, C = x.shape

    # Fold the three biases into one (H, W, C) tensor (added once in-kernel).
    bias3 = (bc[None, None, :].astype(jnp.float32)
             + bh[:, None, None].astype(jnp.float32)
             + bw[None, :, None].astype(jnp.float32))
    wc_t = wc.T                          # so the kernel computes x @ Wc^T directly

    if block_batch is None:
        per_batch_bytes = H * W * C * x.dtype.itemsize
        block_batch = _pick_block_batch(B, per_batch_bytes)
    TB = block_batch
    assert B % TB == 0

    return pl.pallas_call(
        _parallel_sum_kernel,
        out_shape=jax.ShapeDtypeStruct((B, H, W, C), x.dtype),
        grid=(B // TB,),
        in_specs=[
            pl.BlockSpec((TB, H, W, C), lambda b: (b, 0, 0, 0)),
            pl.BlockSpec((C, C), lambda b: (0, 0)),
            pl.BlockSpec((H, H), lambda b: (0, 0)),
            pl.BlockSpec((W, W), lambda b: (0, 0)),
            pl.BlockSpec((H, W, C), lambda b: (0, 0, 0)),
        ],
        out_specs=pl.BlockSpec((TB, H, W, C), lambda b: (b, 0, 0, 0)),
        compiler_params=pltpu.CompilerParams(
            dimension_semantics=("parallel",),
            vmem_limit_bytes=32 * 1024 * 1024),
    )(x, wc_t, wh, ww, bias3)


def parallel_sum_ref(x, wc, bc, wh, bh, ww, bw):
    y1 = jnp.einsum('bhwc,dc->bhwd', x, wc) + bc
    y2 = jnp.einsum('bhwc,gh->bgwc', x, wh) + bh[None, :, None, None]
    y3 = jnp.einsum('bhwc,gw->bhgc', x, ww) + bw[None, None, :, None]
    return y1 + y2 + y3


if __name__ == "__main__":
    B, H, W, C = 2, 8, 8, 32

    key = jax.random.PRNGKey(0)
    kx, kwc, kbc, kwh, kbh, kww, kbw = jax.random.split(key, 7)

    x = jax.random.normal(kx, (B, H, W, C), dtype=jnp.float32)

    # Deterministic parameter init (shapes follow nn.Linear(out, in)).
    wc = jax.random.normal(kwc, (C, C), dtype=jnp.float32) * (1.0 / np.sqrt(C))
    bc = jax.random.normal(kbc, (C,), dtype=jnp.float32) * 0.02
    wh = jax.random.normal(kwh, (H, H), dtype=jnp.float32) * (1.0 / np.sqrt(H))
    bh = jax.random.normal(kbh, (H,), dtype=jnp.float32) * 0.02
    ww = jax.random.normal(kww, (W, W), dtype=jnp.float32) * (1.0 / np.sqrt(W))
    bw = jax.random.normal(kbw, (W,), dtype=jnp.float32) * 0.02

    out = parallel_sum(x, wc, bc, wh, bh, ww, bw)
    out = jax.block_until_ready(out)

    ref = jax.block_until_ready(parallel_sum_ref(x, wc, bc, wh, bh, ww, bw))
    np.testing.assert_allclose(np.asarray(out), np.asarray(ref),
                               rtol=1e-5, atol=1e-4)

    print("KERNEL_OK")
</pallas_src>

<mosaic_0001>
module attributes {stable_mosaic.version = 11 : i64} {
  func.func @_parallel_sum_kernel(%arg0: i32, %arg1: memref<1x8x8x32xf32, #tpu.memory_space<vmem>>, %arg2: memref<32x32xf32, #tpu.memory_space<vmem>>, %arg3: memref<8x8xf32, #tpu.memory_space<vmem>>, %arg4: memref<8x8xf32, #tpu.memory_space<vmem>>, %arg5: memref<8x8x32xf32, #tpu.memory_space<vmem>>, %arg6: memref<1x8x8x32xf32, #tpu.memory_space<vmem>>) attributes {dimension_semantics = [#tpu.dimension_semantics<parallel>], iteration_bounds = array<i64: 2>, scalar_prefetch = 0 : i64, scratch_operands = 0 : i64, tpu.core_type = #tpu.core_type<tc>, window_params = [{transform_indices = @transform_0, window_bounds = array<i64: 1, 8, 8, 32>}, {pipeline_mode = #tpu.pipeline_mode<synchronous>, transform_indices = @transform_1, window_bounds = array<i64: 32, 32>}, {pipeline_mode = #tpu.pipeline_mode<synchronous>, transform_indices = @transform_2, window_bounds = array<i64: 8, 8>}, {pipeline_mode = #tpu.pipeline_mode<synchronous>, transform_indices = @transform_3, window_bounds = array<i64: 8, 8>}, {pipeline_mode = #tpu.pipeline_mode<synchronous>, transform_indices = @transform_4, window_bounds = array<i64: 8, 8, 32>}, {transform_indices = @transform_5, window_bounds = array<i64: 1, 8, 8, 32>}]} {
    %c0 = arith.constant 0 : index
    %c0_0 = arith.constant 0 : index
    %c0_1 = arith.constant 0 : index
    %c0_2 = arith.constant 0 : index
    %0 = vector.load %arg1[%c0, %c0_0, %c0_1, %c0_2] : memref<1x8x8x32xf32, #tpu.memory_space<vmem>>, vector<1x8x8x32xf32>
    %c0_3 = arith.constant 0 : index
    %c0_4 = arith.constant 0 : index
    %1 = vector.load %arg2[%c0_3, %c0_4] : memref<32x32xf32, #tpu.memory_space<vmem>>, vector<32x32xf32>
    %c0_5 = arith.constant 0 : index
    %c0_6 = arith.constant 0 : index
    %2 = vector.load %arg3[%c0_5, %c0_6] : memref<8x8xf32, #tpu.memory_space<vmem>>, vector<8x8xf32>
    %c0_7 = arith.constant 0 : index
    %c0_8 = arith.constant 0 : index
    %3 = vector.load %arg4[%c0_7, %c0_8] : memref<8x8xf32, #tpu.memory_space<vmem>>, vector<8x8xf32>
    %c0_9 = arith.constant 0 : index
    %c0_10 = arith.constant 0 : index
    %c0_11 = arith.constant 0 : index
    %4 = vector.load %arg5[%c0_9, %c0_10, %c0_11] : memref<8x8x32xf32, #tpu.memory_space<vmem>>, vector<8x8x32xf32>
    %5 = vector.shape_cast %0 : vector<1x8x8x32xf32> to vector<8x8x32xf32>
    "tpu.trace_start"() <{level = 10 : i32, message = "nwc,gw->ngc"}> : () -> ()
    %cst = arith.constant dense<0.000000e+00> : vector<8x8x32xf32>
    %6 = tpu.matmul %3, %5, %cst {dimension_numbers = #tpu.dot_dimension_numbers<[1], [1], [0], [0, 2], [0, 0, 1, 0, 1, 2], [], []>} : vector<8x8xf32>, vector<8x8x32xf32>, vector<8x8x32xf32> -> vector<8x8x32xf32>
    %7 = tpu.transpose %6, [1, 0, 2] : vector<8x8x32xf32> -> vector<8x8x32xf32>
    "tpu.trace_stop"() : () -> ()
    %8 = vector.shape_cast %7 : vector<8x8x32xf32> to vector<1x8x8x32xf32>
    %9 = vector.shape_cast %0 : vector<1x8x8x32xf32> to vector<64x32xf32>
    %cst_12 = arith.constant dense<0.000000e+00> : vector<64x32xf32>
    %10 = tpu.matmul %9, %1, %cst_12 {dimension_numbers = #tpu.dot_dimension_numbers<[1], [0], [0], [1], [0, 0, 1, 1], [], []>} : vector<64x32xf32>, vector<32x32xf32>, vector<64x32xf32> -> vector<64x32xf32>
    %11 = vector.shape_cast %10 : vector<64x32xf32> to vector<1x8x8x32xf32>
    %12 = arith.addf %11, %8 : vector<1x8x8x32xf32>
    %13 = vector.shape_cast %4 : vector<8x8x32xf32> to vector<1x8x8x32xf32>
    %14 = arith.addf %12, %13 : vector<1x8x8x32xf32>
    %15 = vector.shape_cast %0 : vector<1x8x8x32xf32> to vector<8x8x32xf32>
    %16 = vector.shape_cast %14 : vector<1x8x8x32xf32> to vector<8x8x32xf32>
    "tpu.trace_start"() <{level = 10 : i32, message = "hwc,gh->gwc"}> : () -> ()
    %cst_13 = arith.constant dense<0.000000e+00> : vector<8x8x32xf32>
    %17 = tpu.matmul %2, %15, %cst_13 {dimension_numbers = #tpu.dot_dimension_numbers<[1], [0], [0], [1, 2], [0, 0, 1, 1, 1, 2], [], []>} : vector<8x8xf32>, vector<8x8x32xf32>, vector<8x8x32xf32> -> vector<8x8x32xf32>
    "tpu.trace_stop"() : () -> ()
    %18 = arith.addf %16, %17 : vector<8x8x32xf32>
    %c0_14 = arith.constant 0 : index
    %c0_15 = arith.constant 0 : index
    %c0_16 = arith.constant 0 : index
    %c0_17 = arith.constant 0 : index
    %19 = vector.load %arg6[%c0_14, %c0_15, %c0_16, %c0_17] : memref<1x8x8x32xf32, #tpu.memory_space<vmem>>, vector<1x8x8x32xf32>
    %20 = vector.shape_cast %19 : vector<1x8x8x32xf32> to vector<8x8x32xf32>
    %21 = vector.shape_cast %18 : vector<8x8x32xf32> to vector<1x8x8x32xf32>
    tpu.vector_store %arg6[%c0_14, %c0_15, %c0_16, %c0_17], %21 {strides = array<i32>} : memref<1x8x8x32xf32, #tpu.memory_space<vmem>>, vector<1x8x8x32xf32>,
    return
  }
  func.func @transform_0(%arg0: i32) -> (i32, i32, i32, i32) {
    %c0_i32 = arith.constant 0 : i32
    %c0_i32_0 = arith.constant 0 : i32
    %c0_i32_1 = arith.constant 0 : i32
    %c0_i32_2 = arith.constant 0 : i32
    return %arg0, %c0_i32, %c0_i32_0, %c0_i32_1 : i32, i32, i32, i32
  }
  func.func @transform_1(%arg0: i32) -> (i32, i32) {
    %c0_i32 = arith.constant 0 : i32
    %c0_i32_0 = arith.constant 0 : i32
    %c0_i32_1 = arith.constant 0 : i32
    return %c0_i32, %c0_i32_0 : i32, i32
  }
  func.func @transform_2(%arg0: i32) -> (i32, i32) {
    %c0_i32 = arith.constant 0 : i32
    %c0_i32_0 = arith.constant 0 : i32
    %c0_i32_1 = arith.constant 0 : i32
    return %c0_i32, %c0_i32_0 : i32, i32
  }
  func.func @transform_3(%arg0: i32) -> (i32, i32) {
    %c0_i32 = arith.constant 0 : i32
    %c0_i32_0 = arith.constant 0 : i32
    %c0_i32_1 = arith.constant 0 : i32
    return %c0_i32, %c0_i32_0 : i32, i32
  }
  func.func @transform_4(%arg0: i32) -> (i32, i32, i32) {
    %c0_i32 = arith.constant 0 : i32
    %c0_i32_0 = arith.constant 0 : i32
    %c0_i32_1 = arith.constant 0 : i32
    %c0_i32_2 = arith.constant 0 : i32
    return %c0_i32, %c0_i32_0, %c0_i32_1 : i32, i32, i32
  }
  func.func @transform_5(%arg0: i32) -> (i32, i32, i32, i32) {
    %c0_i32 = arith.constant 0 : i32
    %c0_i32_0 = arith.constant 0 : i32
    %c0_i32_1 = arith.constant 0 : i32
    %c0_i32_2 = arith.constant 0 : i32
    return %arg0, %c0_i32, %c0_i32_0, %c0_i32_1 : i32, i32, i32, i32
  }
}

</mosaic_0001>

<llo_original>
// kernel: tpu_custom_call.1
$region0: #{tpu_custom_call.1}
  #allocation0 [shape = 'u32[]', space=smem, size = 0x4, offset = 0x4, fixed_abs, tag = 'smem constant byte address 0x4 - core index']
  #allocation1 [shape = 'u32[144,128]{1,0:T(1,128)}', space=vmem, size = 0x12000, scoped, tag = 'internal scratch']
  %s0 = inlined_call_operand.hbm [shape: f32[2,8,8,32], index: 0, kind: input, shape index: {}]
  %s1 = inlined_call_operand.hbm [shape: f32[32,32], index: 1, kind: input, shape index: {}]
  %s2 = inlined_call_operand.hbm [shape: f32[8,8], index: 2, kind: input, shape index: {}]
  %s3 = inlined_call_operand.vmem [shape: f32[8,8], index: 3, kind: input, shape index: {}]
  %s4 = inlined_call_operand.hbm [shape: f32[8,8,32], index: 4, kind: input, shape index: {}]
  %s5 = inlined_call_operand.hbm [shape: f32[2,8,8,32], index: 5, kind: output, shape index: {}]
  %s6 = sld [smem:[#allocation0]]
  $region69: #{tpu_custom_call.1} parent=0
    _
  %s8 = ssub.s32 1, %s6
  %s9 = scalar_select 0, %s8, %s6
  $region1: #{tpu_custom_call.1} parent=0
    #allocation2 [shape = 'u8[65536]{0}', space=vmem, size = 0x10000, scoped, tag = 'input window, operand 0']
    #allocation3 [shape = 's32[2]{0}', space=sflag, size = 0x8, scoped, tag = 'scoped memory for tpu_custom_call.1']
    #allocation4 [shape = 's32[2]{0}', space=sflag, size = 0x8, scoped, tag = 'scoped memory for tpu_custom_call.1']
    #allocation5 [shape = 'u8[16384]{0}', space=vmem, size = 0x4000, scoped, tag = 'input window, operand 1, single buffered']
    #allocation6 [shape = 's32[1]{0}', space=sflag, size = 0x4, scoped, tag = 'scoped memory for tpu_custom_call.1']
    #allocation7 [shape = 'u8[4096]{0}', space=vmem, size = 0x1000, scoped, tag = 'input window, operand 2, single buffered']
    #allocation8 [shape = 'u8[32768]{0}', space=vmem, size = 0x8000, scoped, tag = 'input window, operand 4, single buffered']
    #allocation9 [shape = 's32[1]{0}', space=sflag, size = 0x4, scoped, tag = 'scoped memory for tpu_custom_call.1']
    #allocation10 [shape = 'u8[65536]{0}', space=vmem, size = 0x10000, scoped, tag = 'output window, operand 0']
    %10 = vsyncpa [#allocation3], 0
    %s11 = scalar_lea.sflag [#allocation3], 1
    %12 = vsyncpa %s11, 0
    %13 = vsyncpa [#allocation6], 0
    %14 = vsyncpa [#allocation9], 0
    %15 = vsyncpa [#allocation4], 0
    %s16 = scalar_lea.sflag [#allocation4], 1
    %17 = vsyncpa %s16, 0
    loop: start=0, step=1, limit=4
    $region2: #{tpu_custom_call.1} parent=1 // loop_pre_header
      _
    $region3: #{tpu_custom_call.1} parent=1 // loop_header
      %s19 = sphi 0, %s23
      %p20 = scmp.ge.s32.totalorder %s19, 4
      %s29 = sphi 0, %s31
      %s32 = sphi 0, %s29
      %s33 = sphi 0, %s32
      %s49 = sphi 0, %s33
      %s53 = sphi 0, %s53
      %s55 = sphi 0, %s53
      %s56 = sphi 0, %s55
      %s70 = sphi 0, %s56
      %s74 = sphi 0, %s74
      %s76 = sphi 0, %s74
      %s77 = sphi 0, %s76
      %s91 = sphi 0, %s77
      %s95 = sphi 0, %s95
      %s97 = sphi 0, %s95
      %s98 = sphi 0, %s97
      %s112 = sphi 0, %s98
      %s116 = sphi 0, %s116
      %s118 = sphi 0, %s116
      %s119 = sphi 0, %s118
      %s133 = sphi 0, %s119
      %s139 = sphi 0, %s141
      %s142 = sphi 0, %s139
      %s143 = sphi 0, %s142
      %s159 = sphi 0, %s143
    $region4: #{tpu_custom_call.1} parent=1 // loop_header_branch
      %22 = sbr.rel (%p20) target = $region8
    $region5: #{tpu_custom_call.1} parent=1 // loop_body
      %s24 = ssub.s32 %s19, 1
      %s25 = ssub.s32 %s19, 2
      %s26 = sadd.s32 %s19, 1
      %s27 = ssub.s32 %s19, %s26
      %p28 = scmp.eq.s32.totalorder %s27, 0
      %s30 = sadd.s32 %s29, 1
      %s31 = scalar_select %p28, %s29, %s30
      %p34 = pneg %p28
      %p35 = scmp.eq.s32.totalorder %s19, 1
      %p36 = por %p34, %p35
      %p37 = scmp.ne.s32.totalorder %s29, %s32
      %p38 = scmp.eq.s32.totalorder %s19, 0
      %p39 = por %p37, %p38
      %p40 = scmp.ne.s32.totalorder %s29, %s32
      %p41 = scmp.eq.s32.totalorder %s24, 1
      %p42 = por %p40, %p41
      %p43 = scmp.ne.s32.totalorder %s32, %s33
      %p44 = scmp.eq.s32.totalorder %s24, 0
      %p45 = por %p43, %p44
      %p46 = scmp.ne.s32.totalorder %s32, %s33
      %p47 = scmp.eq.s32.totalorder %s25, 1
      %p48 = por %p46, %p47
      %p50 = scmp.ne.s32.totalorder %s33, %s49
      %p51 = scmp.eq.s32.totalorder %s25, 0
      %p52 = por %p50, %p51
      %s54 = sadd.s32 %s53, 1
      %p57 = scmp.eq.s32.totalorder %s19, 1
      %p58 = scmp.ne.s32.totalorder %s53, %s55
      %p59 = scmp.eq.s32.totalorder %s19, 0
      %p60 = por %p58, %p59
      %p61 = scmp.ne.s32.totalorder %s53, %s55
      %p62 = scmp.eq.s32.totalorder %s24, 1
      %p63 = por %p61, %p62
      %p64 = scmp.ne.s32.totalorder %s55, %s56
      %p65 = scmp.eq.s32.totalorder %s24, 0
      %p66 = por %p64, %p65
      %p67 = scmp.ne.s32.totalorder %s55, %s56
      %p68 = scmp.eq.s32.totalorder %s25, 1
      %p69 = por %p67, %p68
      %p71 = scmp.ne.s32.totalorder %s56, %s70
      %p72 = scmp.eq.s32.totalorder %s25, 0
      %p73 = por %p71, %p72
      %s75 = sadd.s32 %s74, 1
      %p78 = scmp.eq.s32.totalorder %s19, 1
      %p79 = scmp.ne.s32.totalorder %s74, %s76
      %p80 = scmp.eq.s32.totalorder %s19, 0
      %p81 = por %p79, %p80
      %p82 = scmp.ne.s32.totalorder %s74, %s76
      %p83 = scmp.eq.s32.totalorder %s24, 1
      %p84 = por %p82, %p83
      %p85 = scmp.ne.s32.totalorder %s76, %s77
      %p86 = scmp.eq.s32.totalorder %s24, 0
      %p87 = por %p85, %p86
      %p88 = scmp.ne.s32.totalorder %s76, %s77
      %p89 = scmp.eq.s32.totalorder %s25, 1
      %p90 = por %p88, %p89
      %p92 = scmp.ne.s32.totalorder %s77, %s91
      %p93 = scmp.eq.s32.totalorder %s25, 0
      %p94 = por %p92, %p93
      %s96 = sadd.s32 %s95, 1
      %p99 = scmp.eq.s32.totalorder %s19, 1
      %p100 = scmp.ne.s32.totalorder %s95, %s97
      %p101 = scmp.eq.s32.totalorder %s19, 0
      %p102 = por %p100, %p101
      %p103 = scmp.ne.s32.totalorder %s95, %s97
      %p104 = scmp.eq.s32.totalorder %s24, 1
      %p105 = por %p103, %p104
      %p106 = scmp.ne.s32.totalorder %s97, %s98
      %p107 = scmp.eq.s32.totalorder %s24, 0
      %p108 = por %p106, %p107
      %p109 = scmp.ne.s32.totalorder %s97, %s98
      %p110 = scmp.eq.s32.totalorder %s25, 1
      %p111 = por %p109, %p110
      %p113 = scmp.ne.s32.totalorder %s98, %s112
      %p114 = scmp.eq.s32.totalorder %s25, 0
      %p115 = por %p113, %p114
      %s117 = sadd.s32 %s116, 1
      %p120 = scmp.eq.s32.totalorder %s19, 1
      %p121 = scmp.ne.s32.totalorder %s116, %s118
      %p122 = scmp.eq.s32.totalorder %s19, 0
      %p123 = por %p121, %p122
      %p124 = scmp.ne.s32.totalorder %s116, %s118
      %p125 = scmp.eq.s32.totalorder %s24, 1
      %p126 = por %p124, %p125
      %p127 = scmp.ne.s32.totalorder %s118, %s119
      %p128 = scmp.eq.s32.totalorder %s24, 0
      %p129 = por %p127, %p128
      %p130 = scmp.ne.s32.totalorder %s118, %s119
      %p131 = scmp.eq.s32.totalorder %s25, 1
      %p132 = por %p130, %p131
      %p134 = scmp.ne.s32.totalorder %s119, %s133
      %p135 = scmp.eq.s32.totalorder %s25, 0
      %p136 = por %p134, %p135
      %s137 = ssub.s32 %s19, %s26
      %p138 = scmp.eq.s32.totalorder %s137, 0
      %s140 = sadd.s32 %s139, 1
      %s141 = scalar_select %p138, %s139, %s140
      %p144 = pneg %p138
      %p145 = scmp.eq.s32.totalorder %s19, 1
      %p146 = por %p144, %p145
      %p147 = scmp.ne.s32.totalorder %s139, %s142
      %p148 = scmp.eq.s32.totalorder %s19, 0
      %p149 = por %p147, %p148
      %p150 = scmp.ne.s32.totalorder %s139, %s142
      %p151 = scmp.eq.s32.totalorder %s24, 1
      %p152 = por %p150, %p151
      %p153 = scmp.ne.s32.totalorder %s142, %s143
      %p154 = scmp.eq.s32.totalorder %s24, 0
      %p155 = por %p153, %p154
      %p156 = scmp.ne.s32.totalorder %s142, %s143
      %p157 = scmp.eq.s32.totalorder %s25, 1
      %p158 = por %p156, %p157
      %p160 = scmp.ne.s32.totalorder %s143, %s159
      %p161 = scmp.eq.s32.totalorder %s25, 0
      %p162 = por %p160, %p161
      %p163 = scmp.le.s32.totalorder 1, %s19
      %p164 = scmp.lt.s32.totalorder %s19, 3
      %p165 = pnand %p163, %p164
      %p166 = pneg %p165
      // Predicated region
      $region9: #{tpu_custom_call.1} parent=5 // pred_check
        _
      $region10: #{tpu_custom_call.1} parent=5 // pred_check_branch
        %168 = sbr.rel (%p165) target = $region12
      $region11: #{tpu_custom_call.1} parent=5 // pred_region
        %s169 = ssub.s32 %s19, 1
        // Predicated region
        $region13: #{tpu_custom_call.1} parent=11 // pred_check
          %p170 = pneg %p66
        $region14: #{tpu_custom_call.1} parent=11 // pred_check_branch
          %172 = sbr.rel (%p170) target = $region16
        $region15: #{tpu_custom_call.1} parent=11 // pred_region
          %s174 = ssub.s32 512, 512
          %175 = vsyncadd [#allocation6], %s174
          %s176 = sshll.u32 [#allocation5], 4
          %s177 = int_to_ptr.vmem [resolvable:$true] %s176
          %182 = dma.hbm_to_vmem [thread:$0]  %s1, 512, %s177, [#allocation6], 128, 128, 8
        $region16: #{tpu_custom_call.1} parent=11 // pred_fallthru
          _
        // Predicated region
        $region17: #{tpu_custom_call.1} parent=11 // pred_check
          %p183 = pneg %p87
        $region18: #{tpu_custom_call.1} parent=11 // pred_check_branch
          %185 = sbr.rel (%p183) target = $region20
        $region19: #{tpu_custom_call.1} parent=11 // pred_region
          %s187 = ssub.s32 128, 128
          %188 = vsyncadd [#allocation6], %s187
          %s190 = sshll.u32 [#allocation7], 4
          %s191 = int_to_ptr.vmem [resolvable:$true] %s190
          %193 = dma.hbm_to_vmem [thread:$0]  %s2, 128, %s191, [#allocation6]
        $region20: #{tpu_custom_call.1} parent=11 // pred_fallthru
          _
        // Predicated region
        $region21: #{tpu_custom_call.1} parent=11 // pred_check
          %p194 = pneg %p108
        $region22: #{tpu_custom_call.1} parent=11 // pred_check_branch
          %196 = sbr.rel (%p194) target = $region24
        $region23: #{tpu_custom_call.1} parent=11 // pred_region
          _
        $region24: #{tpu_custom_call.1} parent=11 // pred_fallthru
          _
        // Predicated region
        $region25: #{tpu_custom_call.1} parent=11 // pred_check
          %p197 = pneg %p129
        $region26: #{tpu_custom_call.1} parent=11 // pred_check_branch
          %199 = sbr.rel (%p197) target = $region28
        $region27: #{tpu_custom_call.1} parent=11 // pred_region
          %s201 = ssub.s32 1024, 1024
          %202 = vsyncadd [#allocation9], %s201
          %s203 = sshll.u32 [#allocation8], 4
          %s204 = int_to_ptr.vmem [resolvable:$true] %s203
          %209 = dma.hbm_to_vmem [thread:$0]  %s4, 1024, %s204, [#allocation9], 128, 128, 8
        $region28: #{tpu_custom_call.1} parent=11 // pred_fallthru
          _
      $region12: #{tpu_custom_call.1} parent=5 // pred_fallthru
        _
      %p210 = scmp.lt.s32.totalorder %s19, 2
      // Predicated region
      $region29: #{tpu_custom_call.1} parent=5 // pred_check
        %p211 = pneg %p210
      $region30: #{tpu_custom_call.1} parent=5 // pred_check_branch
        %213 = sbr.rel (%p211) target = $region32
      $region31: #{tpu_custom_call.1} parent=5 // pred_region
        // Predicated region
        $region33: #{tpu_custom_call.1} parent=31 // pred_check
          %p214 = pneg %p39
        $region34: #{tpu_custom_call.1} parent=31 // pred_check_branch
          %216 = sbr.rel (%p214) target = $region36
        $region35: #{tpu_custom_call.1} parent=31 // pred_region
          %s217 = sand.u32 %s29, 1
          %s218 = scalar_lea.sflag [#allocation3], %s217
          %s219 = sand.u32 %s29, 1
          %s220 = smul.addr %s219, 64
          %s221 = scalar_lea.vmem [#allocation2], %s220
          %s223 = ssub.s32 1024, 1024
          %224 = vsyncadd %s218, %s223
          %s225 = smul.addr %s19, 8
          %s226 = smul.addr %s225, 128
          %s227 = scalar_lea.hbm %s0, %s226
          %s228 = sshll.u32 %s221, 4
          %s229 = int_to_ptr.vmem [resolvable:$true] %s228
          %234 = dma.hbm_to_vmem [thread:$0]  %s227, 1024, %s229, %s218, 128, 128, 8
        $region36: #{tpu_custom_call.1} parent=31 // pred_fallthru
          _
      $region32: #{tpu_custom_call.1} parent=5 // pred_fallthru
        _
      %p235 = scmp.le.s32.totalorder 1, %s19
      %p236 = scmp.lt.s32.totalorder %s19, 3
      %p237 = pnand %p235, %p236
      %p238 = pneg %p237
      // Predicated region
      $region37: #{tpu_custom_call.1} parent=5 // pred_check
        _
      $region38: #{tpu_custom_call.1} parent=5 // pred_check_branch
        %240 = sbr.rel (%p237) target = $region40
      $region39: #{tpu_custom_call.1} parent=5 // pred_region
        %s241 = ssub.s32 %s19, 1
        %s242 = sand.u32 %s32, 1
        %s243 = scalar_lea.sflag [#allocation3], %s242
        %s244 = sand.u32 %s32, 1
        %s245 = smul.addr %s244, 64
        %s246 = scalar_lea.vmem [#allocation2], %s245
        // Predicated region
        $region41: #{tpu_custom_call.1} parent=39 // pred_check
          %p247 = pneg %p45
        $region42: #{tpu_custom_call.1} parent=39 // pred_check_branch
          %249 = sbr.rel (%p247) target = $region44
        $region43: #{tpu_custom_call.1} parent=39 // pred_region
          %250 = dma.done %s243, 1024
        $region44: #{tpu_custom_call.1} parent=39 // pred_fallthru
          _
        // Predicated region
        $region45: #{tpu_custom_call.1} parent=39 // pred_check
          %p251 = pneg %p66
        $region46: #{tpu_custom_call.1} parent=39 // pred_check_branch
          %253 = sbr.rel (%p251) target = $region48
        $region47: #{tpu_custom_call.1} parent=39 // pred_region
          %254 = dma.done [#allocation6], 512
        $region48: #{tpu_custom_call.1} parent=39 // pred_fallthru
          _
        // Predicated region
        $region49: #{tpu_custom_call.1} parent=39 // pred_check
          %p255 = pneg %p87
        $region50: #{tpu_custom_call.1} parent=39 // pred_check_branch
          %257 = sbr.rel (%p255) target = $region52
        $region51: #{tpu_custom_call.1} parent=39 // pred_region
          %258 = dma.done [#allocation6], 128
        $region52: #{tpu_custom_call.1} parent=39 // pred_fallthru
          _
        // Predicated region
        $region53: #{tpu_custom_call.1} parent=39 // pred_check
          %p259 = pneg %p129
        $region54: #{tpu_custom_call.1} parent=39 // pred_check_branch
          %261 = sbr.rel (%p259) target = $region56
        $region55: #{tpu_custom_call.1} parent=39 // pred_region
          %262 = dma.done [#allocation9], 1024
        $region56: #{tpu_custom_call.1} parent=39 // pred_fallthru
          _
        %s263 = sand.u32 %s32, 1
        %s264 = scalar_lea.sflag [#allocation3], %s263
        %s265 = sand.u32 %s32, 1
        %s266 = smul.addr %s265, 64
        %s267 = scalar_lea.vmem [#allocation2], %s266
        %p268 = pneg %p45
        %p269 = pneg %p42
        %p270 = pneg %p66
        %p271 = pneg %p63
        %p272 = pneg %p87
        %p273 = pneg %p84
        %p274 = pneg %p108
        %p275 = pneg %p105
        %p276 = pneg %p129
        %p277 = pneg %p126
        %p278 = pneg %p155
        %p279 = pneg %p152
        %s280 = sand.u32 %s142, 1
        %s281 = scalar_lea.sflag [#allocation4], %s280
        %s282 = sand.u32 %s142, 1
        %s283 = smul.addr %s282, 64
        %s284 = scalar_lea.vmem [#allocation10], %s283
        %v285 = vld [vmem:[%s246] sm:$0xff]
        %v286 = vld [vmem:[%s246 + $0x8] sm:$0xff]
        %v287 = vld [vmem:[%s246 + $0x10] sm:$0xff]
        %v288 = vld [vmem:[%s246 + $0x18] sm:$0xff]
        %v289 = vld [vmem:[%s246 + $0x20] sm:$0xff]
        %v290 = vld [vmem:[%s246 + $0x28] sm:$0xff]
        %v291 = vld [vmem:[%s246 + $0x30] sm:$0xff]
        %v292 = vld [vmem:[%s246 + $0x38] sm:$0xff]
        %v293 = vld [vmem:[#allocation5] sm:$0xff]
        %v294 = vld [vmem:[#allocation5 + $0x8] sm:$0xff]
        %v295 = vld [vmem:[#allocation5 + $0x10] sm:$0xff]
        %v296 = vld [vmem:[#allocation5 + $0x18] sm:$0xff]
        %v297 = vld [vmem:[#allocation7] sm:$0xff]
        %v298 = vld [vmem:[%s3] sm:$0xff]
        %v299 = vld [vmem:[#allocation8] sm:$0xff]
        %v300 = vld [vmem:[#allocation8 + $0x8] sm:$0xff]
        %v301 = vld [vmem:[#allocation8 + $0x10] sm:$0xff]
        %v302 = vld [vmem:[#allocation8 + $0x18] sm:$0xff]
        %v303 = vld [vmem:[#allocation8 + $0x20] sm:$0xff]
        %v304 = vld [vmem:[#allocation8 + $0x28] sm:$0xff]
        %v305 = vld [vmem:[#allocation8 + $0x30] sm:$0xff]
        %v306 = vld [vmem:[#allocation8 + $0x38] sm:$0xff]
        %v307 = vcombine.low %v285, %v287
        %v308 = vcombine.high %v285, %v287
        %v310 = vunpack.c.l.s4 1983009808
        %v311 = vunpack.c.0.s8 %v310
        %v312 = vlaneseq
        %v313 = vshrl.u32 %v312, 7
        %v314 = vsub.s32 %v311, %v313
        %v315 = vrot.slane %v307, %v314
        %v317 = vunpack.c.l.s4 1983009808
        %v318 = vunpack.c.0.s8 %v317
        %v319 = vlaneseq
        %v320 = vshrl.u32 %v319, 7
        %v321 = vsub.s32 %v318, %v320
        %v322 = vrot.slane %v308, %v321
        %v323 = vcombine.low %v286, %v288
        %v324 = vcombine.high %v286, %v288
        %v326 = vunpack.c.l.s4 1983009808
        %v327 = vunpack.c.0.s8 %v326
        %v328 = vlaneseq
        %v329 = vshrl.u32 %v328, 7
        %v330 = vsub.s32 %v327, %v329
        %v331 = vrot.slane %v323, %v330
        %v333 = vunpack.c.l.s4 1983009808
        %v334 = vunpack.c.0.s8 %v333
        %v335 = vlaneseq
        %v336 = vshrl.u32 %v335, 7
        %v337 = vsub.s32 %v334, %v336
        %v338 = vrot.slane %v324, %v337
        %v339 = vcombine.low %v289, %v291
        %v340 = vcombine.high %v289, %v291
        %v342 = vunpack.c.l.s4 1983009808
        %v343 = vunpack.c.0.s8 %v342
        %v344 = vlaneseq
        %v345 = vshrl.u32 %v344, 7
        %v346 = vsub.s32 %v343, %v345
        %v347 = vrot.slane %v339, %v346
        %v349 = vunpack.c.l.s4 1983009808
        %v350 = vunpack.c.0.s8 %v349
        %v351 = vlaneseq
        %v352 = vshrl.u32 %v351, 7
        %v353 = vsub.s32 %v350, %v352
        %v354 = vrot.slane %v340, %v353
        %v355 = vcombine.low %v290, %v292
        %v356 = vcombine.high %v290, %v292
        %v358 = vunpack.c.l.s4 1983009808
        %v359 = vunpack.c.0.s8 %v358
        %v360 = vlaneseq
        %v361 = vshrl.u32 %v360, 7
        %v362 = vsub.s32 %v359, %v361
        %v363 = vrot.slane %v355, %v362
        %v365 = vunpack.c.l.s4 1983009808
        %v366 = vunpack.c.0.s8 %v365
        %v367 = vlaneseq
        %v368 = vshrl.u32 %v367, 7
        %v369 = vsub.s32 %v366, %v368
        %v370 = vrot.slane %v356, %v369
        %v371 = vcombine.low %v315, %v331
        %v372 = vcombine.high %v315, %v331
        %v374 = vunpack.c.l.s4 1934713408
        %v375 = vunpack.c.0.s8 %v374
        %v376 = vlaneseq
        %v377 = vshrl.u32 %v376, 7
        %v378 = vsub.s32 %v375, %v377
        %v379 = vrot.slane %v371, %v378
        %v381 = vunpack.c.l.s4 1934713408
        %v382 = vunpack.c.0.s8 %v381
        %v383 = vlaneseq
        %v384 = vshrl.u32 %v383, 7
        %v385 = vsub.s32 %v382, %v384
        %v386 = vrot.slane %v372, %v385
        %v387 = vcombine.low %v322, %v338
        %v388 = vcombine.high %v322, %v338
        %v390 = vunpack.c.l.s4 1934713408
        %v391 = vunpack.c.0.s8 %v390
        %v392 = vlaneseq
        %v393 = vshrl.u32 %v392, 7
        %v394 = vsub.s32 %v391, %v393
        %v395 = vrot.slane %v387, %v394
        %v397 = vunpack.c.l.s4 1934713408
        %v398 = vunpack.c.0.s8 %v397
        %v399 = vlaneseq
        %v400 = vshrl.u32 %v399, 7
        %v401 = vsub.s32 %v398, %v400
        %v402 = vrot.slane %v388, %v401
        %v403 = vcombine.low %v347, %v363
        %v404 = vcombine.high %v347, %v363
        %v406 = vunpack.c.l.s4 1934713408
        %v407 = vunpack.c.0.s8 %v406
        %v408 = vlaneseq
        %v409 = vshrl.u32 %v408, 7
        %v410 = vsub.s32 %v407, %v409
        %v411 = vrot.slane %v403, %v410
        %v413 = vunpack.c.l.s4 1934713408
        %v414 = vunpack.c.0.s8 %v413
        %v415 = vlaneseq
        %v416 = vshrl.u32 %v415, 7
        %v417 = vsub.s32 %v414, %v416
        %v418 = vrot.slane %v404, %v417
        %v419 = vcombine.low %v354, %v370
        %v420 = vcombine.high %v354, %v370
        %v422 = vunpack.c.l.s4 1934713408
        %v423 = vunpack.c.0.s8 %v422
        %v424 = vlaneseq
        %v425 = vshrl.u32 %v424, 7
        %v426 = vsub.s32 %v423, %v425
        %v427 = vrot.slane %v419, %v426
        %v429 = vunpack.c.l.s4 1934713408
        %v430 = vunpack.c.0.s8 %v429
        %v431 = vlaneseq
        %v432 = vshrl.u32 %v431, 7
        %v433 = vsub.s32 %v430, %v432
        %v434 = vrot.slane %v420, %v433
        %v435 = vcombine.low %v379, %v411
        %v436 = vcombine.high %v379, %v411
        %v437 = vcombine.low %v386, %v418
        %v438 = vcombine.high %v386, %v418
        %v439 = vcombine.low %v395, %v427
        %v440 = vcombine.high %v395, %v427
        %v441 = vcombine.low %v402, %v434
        %v442 = vcombine.high %v402, %v434
        %v443 = vcombine.low %v435, %v437
        %v444 = vcombine.high %v435, %v437
        %v446 = vunpack.c.l.s4 1983009808
        %v447 = vunpack.c.0.s8 %v446
        %v448 = vlaneseq
        %v449 = vshrl.u32 %v448, 7
        %v450 = vsub.s32 %v447, %v449
        %v451 = vrot.slane %v443, %v450
        %v453 = vunpack.c.l.s4 1983009808
        %v454 = vunpack.c.0.s8 %v453
        %v455 = vlaneseq
        %v456 = vshrl.u32 %v455, 7
        %v457 = vsub.s32 %v454, %v456
        %v458 = vrot.slane %v444, %v457
        %v459 = vcombine.low %v436, %v438
        %v460 = vcombine.high %v436, %v438
        %v462 = vunpack.c.l.s4 1983009808
        %v463 = vunpack.c.0.s8 %v462
        %v464 = vlaneseq
        %v465 = vshrl.u32 %v464, 7
        %v466 = vsub.s32 %v463, %v465
        %v467 = vrot.slane %v459, %v466
        %v469 = vunpack.c.l.s4 1983009808
        %v470 = vunpack.c.0.s8 %v469
        %v471 = vlaneseq
        %v472 = vshrl.u32 %v471, 7
        %v473 = vsub.s32 %v470, %v472
        %v474 = vrot.slane %v460, %v473
        %v475 = vcombine.low %v439, %v441
        %v476 = vcombine.high %v439, %v441
        %v478 = vunpack.c.l.s4 1983009808
        %v479 = vunpack.c.0.s8 %v478
        %v480 = vlaneseq
        %v481 = vshrl.u32 %v480, 7
        %v482 = vsub.s32 %v479, %v481
        %v483 = vrot.slane %v475, %v482
        %v485 = vunpack.c.l.s4 1983009808
        %v486 = vunpack.c.0.s8 %v485
        %v487 = vlaneseq
        %v488 = vshrl.u32 %v487, 7
        %v489 = vsub.s32 %v486, %v488
        %v490 = vrot.slane %v476, %v489
        %v491 = vcombine.low %v440, %v442
        %v492 = vcombine.high %v440, %v442
        %v494 = vunpack.c.l.s4 1983009808
        %v495 = vunpack.c.0.s8 %v494
        %v496 = vlaneseq
        %v497 = vshrl.u32 %v496, 7
        %v498 = vsub.s32 %v495, %v497
        %v499 = vrot.slane %v491, %v498
        %v501 = vunpack.c.l.s4 1983009808
        %v502 = vunpack.c.0.s8 %v501
        %v503 = vlaneseq
        %v504 = vshrl.u32 %v503, 7
        %v505 = vsub.s32 %v502, %v504
        %v506 = vrot.slane %v492, %v505
        %v507 = vcombine.low %v451, %v467
        %v508 = vcombine.high %v451, %v467
        %v510 = vunpack.c.l.s4 1934713408
        %v511 = vunpack.c.0.s8 %v510
        %v512 = vlaneseq
        %v513 = vshrl.u32 %v512, 7
        %v514 = vsub.s32 %v511, %v513
        %v515 = vrot.slane %v507, %v514
        %v517 = vunpack.c.l.s4 1934713408
        %v518 = vunpack.c.0.s8 %v517
        %v519 = vlaneseq
        %v520 = vshrl.u32 %v519, 7
        %v521 = vsub.s32 %v518, %v520
        %v522 = vrot.slane %v508, %v521
        %v523 = vcombine.low %v458, %v474
        %v524 = vcombine.high %v458, %v474
        %v526 = vunpack.c.l.s4 1934713408
        %v527 = vunpack.c.0.s8 %v526
        %v528 = vlaneseq
        %v529 = vshrl.u32 %v528, 7
        %v530 = vsub.s32 %v527, %v529
        %v531 = vrot.slane %v523, %v530
        %v533 = vunpack.c.l.s4 1934713408
        %v534 = vunpack.c.0.s8 %v533
        %v535 = vlaneseq
        %v536 = vshrl.u32 %v535, 7
        %v537 = vsub.s32 %v534, %v536
        %v538 = vrot.slane %v524, %v537
        %v539 = vcombine.low %v483, %v499
        %v540 = vcombine.high %v483, %v499
        %v542 = vunpack.c.l.s4 1934713408
        %v543 = vunpack.c.0.s8 %v542
        %v544 = vlaneseq
        %v545 = vshrl.u32 %v544, 7
        %v546 = vsub.s32 %v543, %v545
        %v547 = vrot.slane %v539, %v546
        %v549 = vunpack.c.l.s4 1934713408
        %v550 = vunpack.c.0.s8 %v549
        %v551 = vlaneseq
        %v552 = vshrl.u32 %v551, 7
        %v553 = vsub.s32 %v550, %v552
        %v554 = vrot.slane %v540, %v553
        %v555 = vcombine.low %v490, %v506
        %v556 = vcombine.high %v490, %v506
        %v558 = vunpack.c.l.s4 1934713408
        %v559 = vunpack.c.0.s8 %v558
        %v560 = vlaneseq
        %v561 = vshrl.u32 %v560, 7
        %v562 = vsub.s32 %v559, %v561
        %v563 = vrot.slane %v555, %v562
        %v565 = vunpack.c.l.s4 1934713408
        %v566 = vunpack.c.0.s8 %v565
        %v567 = vlaneseq
        %v568 = vshrl.u32 %v567, 7
        %v569 = vsub.s32 %v566, %v568
        %v570 = vrot.slane %v556, %v569
        %v571 = vcombine.low %v515, %v547
        %v572 = vcombine.high %v515, %v547
        %v573 = vcombine.low %v522, %v554
        %v574 = vcombine.high %v522, %v554
        %v575 = vcombine.low %v531, %v563
        %v576 = vcombine.high %v531, %v563
        %v577 = vcombine.low %v538, %v570
        %v578 = vcombine.high %v538, %v570
        %580 = vrot.lane.b32.xlu0 %v572, 32
        %v581 = vpop.permute.xlu0 %580
        %584 = vrot.lane.b32.xlu0 %v573, 64
        %v585 = vpop.permute.xlu0 %584
        %588 = vrot.lane.b32.xlu0 %v574, 96
        %v589 = vpop.permute.xlu0 %588
        %592 = vrot.lane.b32.xlu0 %v576, 32
        %v593 = vpop.permute.xlu0 %592
        %596 = vrot.lane.b32.xlu0 %v577, 64
        %v597 = vpop.permute.xlu0 %596
        %600 = vrot.lane.b32.xlu0 %v578, 96
        %v601 = vpop.permute.xlu0 %600
        %vm603 = vcmask 261120
        %v604 = vsel %vm603, %v571, %v581
        %vm605 = vcmask 523264
        %v606 = vsel %vm605, %v604, %v585
        %vm607 = vcmask 785408
        %v608 = vsel %vm607, %v606, %v589
        %v609 = vsel %vm603, %v575, %v593
        %v610 = vsel %vm605, %v609, %v597
        %v611 = vsel %vm607, %v610, %v601
        %v612 = vcombine.low 0.0, 0.0
        %v613 = vcombine.high 0.0, 0.0
        %v615 = vunpack.c.l.s4 1983009808
        %v616 = vunpack.c.0.s8 %v615
        %v617 = vlaneseq
        %v618 = vshrl.u32 %v617, 7
        %v619 = vsub.s32 %v616, %v618
        %v620 = vrot.slane %v612, %v619
        %v622 = vunpack.c.l.s4 1983009808
        %v623 = vunpack.c.0.s8 %v622
        %v624 = vlaneseq
        %v625 = vshrl.u32 %v624, 7
        %v626 = vsub.s32 %v623, %v625
        %v627 = vrot.slane %v613, %v626
        %v628 = vcombine.low %v620, %v620
        %v629 = vcombine.high %v620, %v620
        %v631 = vunpack.c.l.s4 1934713408
        %v632 = vunpack.c.0.s8 %v631
        %v633 = vlaneseq
        %v634 = vshrl.u32 %v633, 7
        %v635 = vsub.s32 %v632, %v634
        %v636 = vrot.slane %v628, %v635
        %v638 = vunpack.c.l.s4 1934713408
        %v639 = vunpack.c.0.s8 %v638
        %v640 = vlaneseq
        %v641 = vshrl.u32 %v640, 7
        %v642 = vsub.s32 %v639, %v641
        %v643 = vrot.slane %v629, %v642
        %v644 = vcombine.low %v627, %v627
        %v645 = vcombine.high %v627, %v627
        %v647 = vunpack.c.l.s4 1934713408
        %v648 = vunpack.c.0.s8 %v647
        %v649 = vlaneseq
        %v650 = vshrl.u32 %v649, 7
        %v651 = vsub.s32 %v648, %v650
        %v652 = vrot.slane %v644, %v651
        %v654 = vunpack.c.l.s4 1934713408
        %v655 = vunpack.c.0.s8 %v654
        %v656 = vlaneseq
        %v657 = vshrl.u32 %v656, 7
        %v658 = vsub.s32 %v655, %v657
        %v659 = vrot.slane %v645, %v658
        %v660 = vcombine.low %v636, %v636
        %v661 = vcombine.high %v636, %v636
        %v662 = vcombine.low %v643, %v643
        %v663 = vcombine.high %v643, %v643
        %v664 = vcombine.low %v652, %v652
        %v665 = vcombine.high %v652, %v652
        %v666 = vcombine.low %v659, %v659
        %v667 = vcombine.high %v659, %v659
        %669 = vrot.lane.b32.xlu0 %v661, 32
        %v670 = vpop.permute.xlu0 %669
        %673 = vrot.lane.b32.xlu0 %v662, 64
        %v674 = vpop.permute.xlu0 %673
        %677 = vrot.lane.b32.xlu0 %v663, 96
        %v678 = vpop.permute.xlu0 %677
        %681 = vrot.lane.b32.xlu0 %v665, 32
        %v682 = vpop.permute.xlu0 %681
        %685 = vrot.lane.b32.xlu0 %v666, 64
        %v686 = vpop.permute.xlu0 %685
        %689 = vrot.lane.b32.xlu0 %v667, 96
        %v690 = vpop.permute.xlu0 %689
        %v692 = vsel %vm603, %v660, %v670
        %v693 = vsel %vm605, %v692, %v674
        %v694 = vsel %vm607, %v693, %v678
        %v695 = vsel %vm603, %v664, %v682
        %v696 = vsel %vm605, %v695, %v686
        %v697 = vsel %vm607, %v696, %v690
        %vm698 = vcmask 64512
        %v700 = vsel %vm698, %v298, 0
        %702 = vmatprep.subr.mxu0 %v611
        %703 = vmatpush1.msra.mxu0 %v608
        %704 = vmatprep.subr.mxu0 0.0
        %705 = vmatpush1.msra.mxu0 0.0
        %706 = vmatprep.subr.mxu0 0.0
        %707 = vmatpush1.msra.mxu0 0.0
        %708 = vmatprep.subr.mxu0 0.0
        %709 = vmatpush1.msra.mxu0 0.0
        %710 = vmatprep.subr.mxu0 0.0
        %711 = vmatpush1.msra.mxu0 0.0
        %712 = vmatprep.subr.mxu0 0.0
        %713 = vmatpush1.msra.mxu0 0.0
        %714 = vmatprep.subr.mxu0 0.0
        %715 = vmatpush1.msra.mxu0 0.0
        %716 = vmatprep.subr.mxu0 0.0
        %717 = vmatpush1.msra.mxu0 0.0
        %718 = vmatprep.subr.mxu0 0.0
        %719 = vmatpush1.msra.mxu0 0.0
        %720 = vmatprep.subr.mxu0 0.0
        %721 = vmatpush1.msra.mxu0 0.0
        %722 = vmatprep.subr.mxu0 0.0
        %723 = vmatpush1.msra.mxu0 0.0
        %724 = vmatprep.subr.mxu0 0.0
        %725 = vmatpush1.msra.mxu0 0.0
        %726 = vmatprep.subr.mxu0 0.0
        %727 = vmatpush1.msra.mxu0 0.0
        %728 = vmatprep.subr.mxu0 0.0
        %729 = vmatpush1.msra.mxu0 0.0
        %730 = vmatprep.subr.mxu0 0.0
        %731 = vmatpush1.msra.mxu0 0.0
        %732 = vmatprep.subr.mxu0 0.0
        %733 = vmatpush1.msra.mxu0 0.0
        %734 = vmatprep.subr.mxu0 0.0
        %735 = vmatpush1.msra.mxu0 0.0
        %736 = vmatprep.subr.mxu0 0.0
        %737 = vmatpush1.msra.mxu0 0.0
        %738 = vmatprep.subr.mxu0 0.0
        %739 = vmatpush1.msra.mxu0 0.0
        %740 = vmatprep.subr.mxu0 0.0
        %741 = vmatpush1.msra.mxu0 0.0
        %742 = vmatprep.subr.mxu0 0.0
        %743 = vmatpush1.msra.mxu0 0.0
        %744 = vmatprep.subr.mxu0 0.0
        %745 = vmatpush1.msra.mxu0 0.0
        %746 = vmatprep.subr.mxu0 0.0
        %747 = vmatpush1.msra.mxu0 0.0
        %748 = vmatprep.subr.mxu0 0.0
        %749 = vmatpush1.msra.mxu0 0.0
        %750 = vmatprep.subr.mxu0 0.0
        %751 = vmatpush1.msra.mxu0 0.0
        %752 = vmatprep.subr.mxu0 0.0
        %753 = vmatpush1.msra.mxu0 0.0
        %754 = vmatprep.subr.mxu0 0.0
        %755 = vmatpush1.msra.mxu0 0.0
        %756 = vmatprep.subr.mxu0 0.0
        %757 = vmatpush1.msra.mxu0 0.0
        %758 = vmatprep.subr.mxu0 0.0
        %759 = vmatpush1.msra.mxu0 0.0
        %760 = vmatprep.subr.mxu0 0.0
        %761 = vmatpush1.msra.mxu0 0.0
        %762 = vmatprep.subr.mxu0 0.0
        %763 = vmatpush1.msra.mxu0 0.0
        %764 = vmatprep.subr.mxu0 0.0
        %765 = vmatpush1.msra.mxu0 0.0
        %766 = vmatprep.mubr.f32.mxu0 0.0
        %767 = vmatmul.mubr.f32.gmra.mrb[0].mxu0 %v700
        %v768 = vpop.f32.mrb[0].mxu0
        %v769 = vadd.f32 %v694, %v768
        %v770 = vpop.f32.mrb[0].mxu0
        %v771 = vadd.f32 %v697, %v770
        %772 = vdwg.mxu0
        %774 = vrot.lane.b32.xlu0 %v769, 96
        %v775 = vpop.permute.xlu0 %774
        %777 = vrot.lane.b32.xlu0 %v769, 64
        %v778 = vpop.permute.xlu0 %777
        %780 = vrot.lane.b32.xlu0 %v769, 32
        %v781 = vpop.permute.xlu0 %780
        %784 = vrot.lane.b32.xlu0 %v771, 96
        %v785 = vpop.permute.xlu0 %784
        %787 = vrot.lane.b32.xlu0 %v771, 64
        %v788 = vpop.permute.xlu0 %787
        %790 = vrot.lane.b32.xlu0 %v771, 32
        %v791 = vpop.permute.xlu0 %790
        %v793 = vcombine.low %v769, %v778
        %v794 = vcombine.high %v769, %v778
        %v796 = vunpack.c.l.s4 1983009808
        %v797 = vunpack.c.0.s8 %v796
        %v798 = vlaneseq
        %v799 = vshrl.u32 %v798, 7
        %v800 = vsub.s32 %v797, %v799
        %v801 = vrot.slane %v793, %v800
        %v803 = vunpack.c.l.s4 1983009808
        %v804 = vunpack.c.0.s8 %v803
        %v805 = vlaneseq
        %v806 = vshrl.u32 %v805, 7
        %v807 = vsub.s32 %v804, %v806
        %v808 = vrot.slane %v794, %v807
        %v809 = vcombine.low %v775, %v781
        %v810 = vcombine.high %v775, %v781
        %v812 = vunpack.c.l.s4 1983009808
        %v813 = vunpack.c.0.s8 %v812
        %v814 = vlaneseq
        %v815 = vshrl.u32 %v814, 7
        %v816 = vsub.s32 %v813, %v815
        %v817 = vrot.slane %v809, %v816
        %v819 = vunpack.c.l.s4 1983009808
        %v820 = vunpack.c.0.s8 %v819
        %v821 = vlaneseq
        %v822 = vshrl.u32 %v821, 7
        %v823 = vsub.s32 %v820, %v822
        %v824 = vrot.slane %v810, %v823
        %v825 = vcombine.low %v771, %v788
        %v826 = vcombine.high %v771, %v788
        %v828 = vunpack.c.l.s4 1983009808
        %v829 = vunpack.c.0.s8 %v828
        %v830 = vlaneseq
        %v831 = vshrl.u32 %v830, 7
        %v832 = vsub.s32 %v829, %v831
        %v833 = vrot.slane %v825, %v832
        %v835 = vunpack.c.l.s4 1983009808
        %v836 = vunpack.c.0.s8 %v835
        %v837 = vlaneseq
        %v838 = vshrl.u32 %v837, 7
        %v839 = vsub.s32 %v836, %v838
        %v840 = vrot.slane %v826, %v839
        %v841 = vcombine.low %v785, %v791
        %v842 = vcombine.high %v785, %v791
        %v844 = vunpack.c.l.s4 1983009808
        %v845 = vunpack.c.0.s8 %v844
        %v846 = vlaneseq
        %v847 = vshrl.u32 %v846, 7
        %v848 = vsub.s32 %v845, %v847
        %v849 = vrot.slane %v841, %v848
        %v851 = vunpack.c.l.s4 1983009808
        %v852 = vunpack.c.0.s8 %v851
        %v853 = vlaneseq
        %v854 = vshrl.u32 %v853, 7
        %v855 = vsub.s32 %v852, %v854
        %v856 = vrot.slane %v842, %v855
        %v857 = vcombine.low %v801, %v817
        %v858 = vcombine.high %v801, %v817
        %v860 = vunpack.c.l.s4 1934713408
        %v861 = vunpack.c.0.s8 %v860
        %v862 = vlaneseq
        %v863 = vshrl.u32 %v862, 7
        %v864 = vsub.s32 %v861, %v863
        %v865 = vrot.slane %v857, %v864
        %v867 = vunpack.c.l.s4 1934713408
        %v868 = vunpack.c.0.s8 %v867
        %v869 = vlaneseq
        %v870 = vshrl.u32 %v869, 7
        %v871 = vsub.s32 %v868, %v870
        %v872 = vrot.slane %v858, %v871
        %v873 = vcombine.low %v808, %v824
        %v874 = vcombine.high %v808, %v824
        %v876 = vunpack.c.l.s4 1934713408
        %v877 = vunpack.c.0.s8 %v876
        %v878 = vlaneseq
        %v879 = vshrl.u32 %v878, 7
        %v880 = vsub.s32 %v877, %v879
        %v881 = vrot.slane %v873, %v880
        %v883 = vunpack.c.l.s4 1934713408
        %v884 = vunpack.c.0.s8 %v883
        %v885 = vlaneseq
        %v886 = vshrl.u32 %v885, 7
        %v887 = vsub.s32 %v884, %v886
        %v888 = vrot.slane %v874, %v887
        %v889 = vcombine.low %v833, %v849
        %v890 = vcombine.high %v833, %v849
        %v892 = vunpack.c.l.s4 1934713408
        %v893 = vunpack.c.0.s8 %v892
        %v894 = vlaneseq
        %v895 = vshrl.u32 %v894, 7
        %v896 = vsub.s32 %v893, %v895
        %v897 = vrot.slane %v889, %v896
        %v899 = vunpack.c.l.s4 1934713408
        %v900 = vunpack.c.0.s8 %v899
        %v901 = vlaneseq
        %v902 = vshrl.u32 %v901, 7
        %v903 = vsub.s32 %v900, %v902
        %v904 = vrot.slane %v890, %v903
        %v905 = vcombine.low %v840, %v856
        %v906 = vcombine.high %v840, %v856
        %v908 = vunpack.c.l.s4 1934713408
        %v909 = vunpack.c.0.s8 %v908
        %v910 = vlaneseq
        %v911 = vshrl.u32 %v910, 7
        %v912 = vsub.s32 %v909, %v911
        %v913 = vrot.slane %v905, %v912
        %v915 = vunpack.c.l.s4 1934713408
        %v916 = vunpack.c.0.s8 %v915
        %v917 = vlaneseq
        %v918 = vshrl.u32 %v917, 7
        %v919 = vsub.s32 %v916, %v918
        %v920 = vrot.slane %v906, %v919
        %v921 = vcombine.low %v865, %v897
        %v922 = vcombine.high %v865, %v897
        %v923 = vcombine.low %v872, %v904
        %v924 = vcombine.high %v872, %v904
        %v925 = vcombine.low %v881, %v913
        %v926 = vcombine.high %v881, %v913
        %v927 = vcombine.low %v888, %v920
        %v928 = vcombine.high %v888, %v920
        %v929 = vcombine.low %v921, %v923
        %v930 = vcombine.high %v921, %v923
        %v932 = vunpack.c.l.s4 1983009808
        %v933 = vunpack.c.0.s8 %v932
        %v934 = vlaneseq
        %v935 = vshrl.u32 %v934, 7
        %v936 = vsub.s32 %v933, %v935
        %v937 = vrot.slane %v929, %v936
        %v939 = vunpack.c.l.s4 1983009808
        %v940 = vunpack.c.0.s8 %v939
        %v941 = vlaneseq
        %v942 = vshrl.u32 %v941, 7
        %v943 = vsub.s32 %v940, %v942
        %v944 = vrot.slane %v930, %v943
        %v945 = vcombine.low %v922, %v924
        %v946 = vcombine.high %v922, %v924
        %v948 = vunpack.c.l.s4 1983009808
        %v949 = vunpack.c.0.s8 %v948
        %v950 = vlaneseq
        %v951 = vshrl.u32 %v950, 7
        %v952 = vsub.s32 %v949, %v951
        %v953 = vrot.slane %v945, %v952
        %v955 = vunpack.c.l.s4 1983009808
        %v956 = vunpack.c.0.s8 %v955
        %v957 = vlaneseq
        %v958 = vshrl.u32 %v957, 7
        %v959 = vsub.s32 %v956, %v958
        %v960 = vrot.slane %v946, %v959
        %v961 = vcombine.low %v925, %v927
        %v962 = vcombine.high %v925, %v927
        %v964 = vunpack.c.l.s4 1983009808
        %v965 = vunpack.c.0.s8 %v964
        %v966 = vlaneseq
        %v967 = vshrl.u32 %v966, 7
        %v968 = vsub.s32 %v965, %v967
        %v969 = vrot.slane %v961, %v968
        %v971 = vunpack.c.l.s4 1983009808
        %v972 = vunpack.c.0.s8 %v971
        %v973 = vlaneseq
        %v974 = vshrl.u32 %v973, 7
        %v975 = vsub.s32 %v972, %v974
        %v976 = vrot.slane %v962, %v975
        %v977 = vcombine.low %v926, %v928
        %v978 = vcombine.high %v926, %v928
        %v980 = vunpack.c.l.s4 1983009808
        %v981 = vunpack.c.0.s8 %v980
        %v982 = vlaneseq
        %v983 = vshrl.u32 %v982, 7
        %v984 = vsub.s32 %v981, %v983
        %v985 = vrot.slane %v977, %v984
        %v987 = vunpack.c.l.s4 1983009808
        %v988 = vunpack.c.0.s8 %v987
        %v989 = vlaneseq
        %v990 = vshrl.u32 %v989, 7
        %v991 = vsub.s32 %v988, %v990
        %v992 = vrot.slane %v978, %v991
        %v993 = vcombine.low %v937, %v953
        %v994 = vcombine.high %v937, %v953
        %v996 = vunpack.c.l.s4 1934713408
        %v997 = vunpack.c.0.s8 %v996
        %v998 = vlaneseq
        %v999 = vshrl.u32 %v998, 7
        %v1000 = vsub.s32 %v997, %v999
        %v1001 = vrot.slane %v993, %v1000
        %v1003 = vunpack.c.l.s4 1934713408
        %v1004 = vunpack.c.0.s8 %v1003
        %v1005 = vlaneseq
        %v1006 = vshrl.u32 %v1005, 7
        %v1007 = vsub.s32 %v1004, %v1006
        %v1008 = vrot.slane %v994, %v1007
        %v1009 = vcombine.low %v944, %v960
        %v1010 = vcombine.high %v944, %v960
        %v1012 = vunpack.c.l.s4 1934713408
        %v1013 = vunpack.c.0.s8 %v1012
        %v1014 = vlaneseq
        %v1015 = vshrl.u32 %v1014, 7
        %v1016 = vsub.s32 %v1013, %v1015
        %v1017 = vrot.slane %v1009, %v1016
        %v1019 = vunpack.c.l.s4 1934713408
        %v1020 = vunpack.c.0.s8 %v1019
        %v1021 = vlaneseq
        %v1022 = vshrl.u32 %v1021, 7
        %v1023 = vsub.s32 %v1020, %v1022
        %v1024 = vrot.slane %v1010, %v1023
        %v1025 = vcombine.low %v969, %v985
        %v1026 = vcombine.high %v969, %v985
        %v1028 = vunpack.c.l.s4 1934713408
        %v1029 = vunpack.c.0.s8 %v1028
        %v1030 = vlaneseq
        %v1031 = vshrl.u32 %v1030, 7
        %v1032 = vsub.s32 %v1029, %v1031
        %v1033 = vrot.slane %v1025, %v1032
        %v1035 = vunpack.c.l.s4 1934713408
        %v1036 = vunpack.c.0.s8 %v1035
        %v1037 = vlaneseq
        %v1038 = vshrl.u32 %v1037, 7
        %v1039 = vsub.s32 %v1036, %v1038
        %v1040 = vrot.slane %v1026, %v1039
        %v1041 = vcombine.low %v976, %v992
        %v1042 = vcombine.high %v976, %v992
        %v1044 = vunpack.c.l.s4 1934713408
        %v1045 = vunpack.c.0.s8 %v1044
        %v1046 = vlaneseq
        %v1047 = vshrl.u32 %v1046, 7
        %v1048 = vsub.s32 %v1045, %v1047
        %v1049 = vrot.slane %v1041, %v1048
        %v1051 = vunpack.c.l.s4 1934713408
        %v1052 = vunpack.c.0.s8 %v1051
        %v1053 = vlaneseq
        %v1054 = vshrl.u32 %v1053, 7
        %v1055 = vsub.s32 %v1052, %v1054
        %v1056 = vrot.slane %v1042, %v1055
        %v1057 = vcombine.low %v1001, %v1033
        %v1058 = vcombine.high %v1001, %v1033
        %v1059 = vcombine.low %v1008, %v1040
        %v1060 = vcombine.high %v1008, %v1040
        %v1061 = vcombine.low %v1017, %v1049
        %v1062 = vcombine.high %v1017, %v1049
        %v1063 = vcombine.low %v1024, %v1056
        %v1064 = vcombine.high %v1024, %v1056
        %v1066 = vsel %vm603, %v285, 0
        %v1069 = vsel %vm603, %v286, 0
        %v1072 = vsel %vm603, %v287, 0
        %v1075 = vsel %vm603, %v288, 0
        %v1078 = vsel %vm603, %v289, 0
        %v1081 = vsel %vm603, %v290, 0
        %v1084 = vsel %vm603, %v291, 0
        %v1087 = vsel %vm603, %v292, 0
        %1089 = vmatprep.subr.mxu0 0.0
        %1090 = vmatpush1.msra.mxu0 %v293
        %1091 = vmatprep.subr.mxu0 0.0
        %1092 = vmatpush1.msra.mxu0 %v294
        %1093 = vmatprep.subr.mxu0 0.0
        %1094 = vmatpush1.msra.mxu0 %v295
        %1095 = vmatprep.subr.mxu0 0.0
        %1096 = vmatpush1.msra.mxu0 %v296
        %1097 = vmatprep.subr.mxu0 0.0
        %1098 = vmatpush1.msra.mxu0 0.0
        %1099 = vmatprep.subr.mxu0 0.0
        %1100 = vmatpush1.msra.mxu0 0.0
        %1101 = vmatprep.subr.mxu0 0.0
        %1102 = vmatpush1.msra.mxu0 0.0
        %1103 = vmatprep.subr.mxu0 0.0
        %1104 = vmatpush1.msra.mxu0 0.0
        %1105 = vmatprep.subr.mxu0 0.0
        %1106 = vmatpush1.msra.mxu0 0.0
        %1107 = vmatprep.subr.mxu0 0.0
        %1108 = vmatpush1.msra.mxu0 0.0
        %1109 = vmatprep.subr.mxu0 0.0
        %1110 = vmatpush1.msra.mxu0 0.0
        %1111 = vmatprep.subr.mxu0 0.0
        %1112 = vmatpush1.msra.mxu0 0.0
        %1113 = vmatprep.subr.mxu0 0.0
        %1114 = vmatpush1.msra.mxu0 0.0
        %1115 = vmatprep.subr.mxu0 0.0
        %1116 = vmatpush1.msra.mxu0 0.0
        %1117 = vmatprep.subr.mxu0 0.0
        %1118 = vmatpush1.msra.mxu0 0.0
        %1119 = vmatprep.subr.mxu0 0.0
        %1120 = vmatpush1.msra.mxu0 0.0
        %1121 = vmatprep.subr.mxu0 0.0
        %1122 = vmatpush1.msra.mxu0 0.0
        %1123 = vmatprep.subr.mxu0 0.0
        %1124 = vmatpush1.msra.mxu0 0.0
        %1125 = vmatprep.subr.mxu0 0.0
        %1126 = vmatpush1.msra.mxu0 0.0
        %1127 = vmatprep.subr.mxu0 0.0
        %1128 = vmatpush1.msra.mxu0 0.0
        %1129 = vmatprep.subr.mxu0 0.0
        %1130 = vmatpush1.msra.mxu0 0.0
        %1131 = vmatprep.subr.mxu0 0.0
        %1132 = vmatpush1.msra.mxu0 0.0
        %1133 = vmatprep.subr.mxu0 0.0
        %1134 = vmatpush1.msra.mxu0 0.0
        %1135 = vmatprep.subr.mxu0 0.0
        %1136 = vmatpush1.msra.mxu0 0.0
        %1137 = vmatprep.subr.mxu0 0.0
        %1138 = vmatpush1.msra.mxu0 0.0
        %1139 = vmatprep.subr.mxu0 0.0
        %1140 = vmatpush1.msra.mxu0 0.0
        %1141 = vmatprep.subr.mxu0 0.0
        %1142 = vmatpush1.msra.mxu0 0.0
        %1143 = vmatprep.subr.mxu0 0.0
        %1144 = vmatpush1.msra.mxu0 0.0
        %1145 = vmatprep.subr.mxu0 0.0
        %1146 = vmatpush1.msra.mxu0 0.0
        %1147 = vmatprep.subr.mxu0 0.0
        %1148 = vmatpush1.msra.mxu0 0.0
        %1149 = vmatprep.subr.mxu0 0.0
        %1150 = vmatpush1.msra.mxu0 0.0
        %1151 = vmatprep.subr.mxu0 0.0
        %1152 = vmatpush1.msra.mxu0 0.0
        %1153 = vmatprep.mubr.f32.mxu0 0.0
        %1154 = vmatmul.mubr.f32.gmra.mrb[0].mxu0 %v1066
        %v1155 = vpop.f32.mrb[0].mxu0
        %v1156 = vadd.f32 0.0, %v1155
        %v1157 = vpop.f32.mrb[0].mxu0
        %1158 = vmatprep.mubr.f32.mxu0 0.0
        %1159 = vmatmul.mubr.f32.gmra.mrb[0].mxu0 %v1069
        %v1160 = vpop.f32.mrb[0].mxu0
        %v1161 = vadd.f32 0.0, %v1160
        %v1162 = vpop.f32.mrb[0].mxu0
        %1163 = vmatprep.mubr.f32.mxu0 0.0
        %1164 = vmatmul.mubr.f32.gmra.mrb[0].mxu0 %v1072
        %v1165 = vpop.f32.mrb[0].mxu0
        %v1166 = vadd.f32 0.0, %v1165
        %v1167 = vpop.f32.mrb[0].mxu0
        %1168 = vmatprep.mubr.f32.mxu0 0.0
        %1169 = vmatmul.mubr.f32.gmra.mrb[0].mxu0 %v1075
        %v1170 = vpop.f32.mrb[0].mxu0
        %v1171 = vadd.f32 0.0, %v1170
        %v1172 = vpop.f32.mrb[0].mxu0
        %1173 = vmatprep.mubr.f32.mxu0 0.0
        %1174 = vmatmul.mubr.f32.gmra.mrb[0].mxu0 %v1078
        %v1175 = vpop.f32.mrb[0].mxu0
        %v1176 = vadd.f32 0.0, %v1175
        %v1177 = vpop.f32.mrb[0].mxu0
        %1178 = vmatprep.mubr.f32.mxu0 0.0
        %1179 = vmatmul.mubr.f32.gmra.mrb[0].mxu0 %v1081
        %v1180 = vpop.f32.mrb[0].mxu0
        %v1181 = vadd.f32 0.0, %v1180
        %v1182 = vpop.f32.mrb[0].mxu0
        %1183 = vmatprep.mubr.f32.mxu0 0.0
        %1184 = vmatmul.mubr.f32.gmra.mrb[0].mxu0 %v1084
        %v1185 = vpop.f32.mrb[0].mxu0
        %v1186 = vadd.f32 0.0, %v1185
        %v1187 = vpop.f32.mrb[0].mxu0
        %1188 = vmatprep.mubr.f32.mxu0 0.0
        %1189 = vmatmul.mubr.f32.gmra.mrb[0].mxu0 %v1087
        %v1190 = vpop.f32.mrb[0].mxu0
        %v1191 = vadd.f32 0.0, %v1190
        %v1192 = vpop.f32.mrb[0].mxu0
        %1193 = vdwg.mxu0
        %v1194 = vadd.f32 %v1156, %v1057
        %v1195 = vadd.f32 %v1161, %v1058
        %v1196 = vadd.f32 %v1166, %v1059
        %v1197 = vadd.f32 %v1171, %v1060
        %v1198 = vadd.f32 %v1176, %v1061
        %v1199 = vadd.f32 %v1181, %v1062
        %v1200 = vadd.f32 %v1186, %v1063
        %v1201 = vadd.f32 %v1191, %v1064
        %v1202 = vadd.f32 %v1194, %v299
        %v1203 = vadd.f32 %v1195, %v300
        %v1204 = vadd.f32 %v1196, %v301
        %v1205 = vadd.f32 %v1197, %v302
        %v1206 = vadd.f32 %v1198, %v303
        %v1207 = vadd.f32 %v1199, %v304
        %v1208 = vadd.f32 %v1200, %v305
        %v1209 = vadd.f32 %v1201, %v306
        %1211 = vrot.lane.b32.xlu0 %v436, 32
        %v1212 = vpop.permute.xlu0 %1211
        %1215 = vrot.lane.b32.xlu0 %v437, 64
        %v1216 = vpop.permute.xlu0 %1215
        %1219 = vrot.lane.b32.xlu0 %v438, 96
        %v1220 = vpop.permute.xlu0 %1219
        %1223 = vrot.lane.b32.xlu0 %v440, 32
        %v1224 = vpop.permute.xlu0 %1223
        %1227 = vrot.lane.b32.xlu0 %v441, 64
        %v1228 = vpop.permute.xlu0 %1227
        %1231 = vrot.lane.b32.xlu0 %v442, 96
        %v1232 = vpop.permute.xlu0 %1231
        %v1234 = vsel %vm603, %v435, %v1212
        %v1235 = vsel %vm605, %v1234, %v1216
        %v1236 = vsel %vm607, %v1235, %v1220
        %v1237 = vsel %vm603, %v439, %v1224
        %v1238 = vsel %vm605, %v1237, %v1228
        %v1239 = vsel %vm607, %v1238, %v1232
        %v1241 = vsel %vm698, %v297, 0
        %1243 = vmatprep.subr.mxu0 %v1239
        %1244 = vmatpush1.msra.mxu0 %v1236
        %1245 = vmatprep.subr.mxu0 0.0
        %1246 = vmatpush1.msra.mxu0 0.0
        %1247 = vmatprep.subr.mxu0 0.0
        %1248 = vmatpush1.msra.mxu0 0.0
        %1249 = vmatprep.subr.mxu0 0.0
        %1250 = vmatpush1.msra.mxu0 0.0
        %1251 = vmatprep.subr.mxu0 0.0
        %1252 = vmatpush1.msra.mxu0 0.0
        %1253 = vmatprep.subr.mxu0 0.0
        %1254 = vmatpush1.msra.mxu0 0.0
        %1255 = vmatprep.subr.mxu0 0.0
        %1256 = vmatpush1.msra.mxu0 0.0
        %1257 = vmatprep.subr.mxu0 0.0
        %1258 = vmatpush1.msra.mxu0 0.0
        %1259 = vmatprep.subr.mxu0 0.0
        %1260 = vmatpush1.msra.mxu0 0.0
        %1261 = vmatprep.subr.mxu0 0.0
        %1262 = vmatpush1.msra.mxu0 0.0
        %1263 = vmatprep.subr.mxu0 0.0
        %1264 = vmatpush1.msra.mxu0 0.0
        %1265 = vmatprep.subr.mxu0 0.0
        %1266 = vmatpush1.msra.mxu0 0.0
        %1267 = vmatprep.subr.mxu0 0.0
        %1268 = vmatpush1.msra.mxu0 0.0
        %1269 = vmatprep.subr.mxu0 0.0
        %1270 = vmatpush1.msra.mxu0 0.0
        %1271 = vmatprep.subr.mxu0 0.0
        %1272 = vmatpush1.msra.mxu0 0.0
        %1273 = vmatprep.subr.mxu0 0.0
        %1274 = vmatpush1.msra.mxu0 0.0
        %1275 = vmatprep.subr.mxu0 0.0
        %1276 = vmatpush1.msra.mxu0 0.0
        %1277 = vmatprep.subr.mxu0 0.0
        %1278 = vmatpush1.msra.mxu0 0.0
        %1279 = vmatprep.subr.mxu0 0.0
        %1280 = vmatpush1.msra.mxu0 0.0
        %1281 = vmatprep.subr.mxu0 0.0
        %1282 = vmatpush1.msra.mxu0 0.0
        %1283 = vmatprep.subr.mxu0 0.0
        %1284 = vmatpush1.msra.mxu0 0.0
        %1285 = vmatprep.subr.mxu0 0.0
        %1286 = vmatpush1.msra.mxu0 0.0
        %1287 = vmatprep.subr.mxu0 0.0
        %1288 = vmatpush1.msra.mxu0 0.0
        %1289 = vmatprep.subr.mxu0 0.0
        %1290 = vmatpush1.msra.mxu0 0.0
        %1291 = vmatprep.subr.mxu0 0.0
        %1292 = vmatpush1.msra.mxu0 0.0
        %1293 = vmatprep.subr.mxu0 0.0
        %1294 = vmatpush1.msra.mxu0 0.0
        %1295 = vmatprep.subr.mxu0 0.0
        %1296 = vmatpush1.msra.mxu0 0.0
        %1297 = vmatprep.subr.mxu0 0.0
        %1298 = vmatpush1.msra.mxu0 0.0
        %1299 = vmatprep.subr.mxu0 0.0
        %1300 = vmatpush1.msra.mxu0 0.0
        %1301 = vmatprep.subr.mxu0 0.0
        %1302 = vmatpush1.msra.mxu0 0.0
        %1303 = vmatprep.subr.mxu0 0.0
        %1304 = vmatpush1.msra.mxu0 0.0
        %1305 = vmatprep.subr.mxu0 0.0
        %1306 = vmatpush1.msra.mxu0 0.0
        %1307 = vmatprep.mubr.f32.mxu0 0.0
        %1308 = vmatmul.mubr.f32.gmra.mrb[0].mxu0 %v1241
        %v1309 = vpop.f32.mrb[0].mxu0
        %v1310 = vadd.f32 %v694, %v1309
        %v1311 = vpop.f32.mrb[0].mxu0
        %v1312 = vadd.f32 %v697, %v1311
        %1313 = vdwg.mxu0
        %1315 = vrot.lane.b32.xlu0 %v1310, 96
        %v1316 = vpop.permute.xlu0 %1315
        %1318 = vrot.lane.b32.xlu0 %v1310, 64
        %v1319 = vpop.permute.xlu0 %1318
        %1321 = vrot.lane.b32.xlu0 %v1310, 32
        %v1322 = vpop.permute.xlu0 %1321
        %1325 = vrot.lane.b32.xlu0 %v1312, 96
        %v1326 = vpop.permute.xlu0 %1325
        %1328 = vrot.lane.b32.xlu0 %v1312, 64
        %v1329 = vpop.permute.xlu0 %1328
        %1331 = vrot.lane.b32.xlu0 %v1312, 32
        %v1332 = vpop.permute.xlu0 %1331
        %v1334 = vcombine.low %v1310, %v1319
        %v1335 = vcombine.high %v1310, %v1319
        %v1337 = vunpack.c.l.s4 1983009808
        %v1338 = vunpack.c.0.s8 %v1337
        %v1339 = vlaneseq
        %v1340 = vshrl.u32 %v1339, 7
        %v1341 = vsub.s32 %v1338, %v1340
        %v1342 = vrot.slane %v1334, %v1341
        %v1344 = vunpack.c.l.s4 1983009808
        %v1345 = vunpack.c.0.s8 %v1344
        %v1346 = vlaneseq
        %v1347 = vshrl.u32 %v1346, 7
        %v1348 = vsub.s32 %v1345, %v1347
        %v1349 = vrot.slane %v1335, %v1348
        %v1350 = vcombine.low %v1316, %v1322
        %v1351 = vcombine.high %v1316, %v1322
        %v1353 = vunpack.c.l.s4 1983009808
        %v1354 = vunpack.c.0.s8 %v1353
        %v1355 = vlaneseq
        %v1356 = vshrl.u32 %v1355, 7
        %v1357 = vsub.s32 %v1354, %v1356
        %v1358 = vrot.slane %v1350, %v1357
        %v1360 = vunpack.c.l.s4 1983009808
        %v1361 = vunpack.c.0.s8 %v1360
        %v1362 = vlaneseq
        %v1363 = vshrl.u32 %v1362, 7
        %v1364 = vsub.s32 %v1361, %v1363
        %v1365 = vrot.slane %v1351, %v1364
        %v1366 = vcombine.low %v1312, %v1329
        %v1367 = vcombine.high %v1312, %v1329
        %v1369 = vunpack.c.l.s4 1983009808
        %v1370 = vunpack.c.0.s8 %v1369
        %v1371 = vlaneseq
        %v1372 = vshrl.u32 %v1371, 7
        %v1373 = vsub.s32 %v1370, %v1372
        %v1374 = vrot.slane %v1366, %v1373
        %v1376 = vunpack.c.l.s4 1983009808
        %v1377 = vunpack.c.0.s8 %v1376
        %v1378 = vlaneseq
        %v1379 = vshrl.u32 %v1378, 7
        %v1380 = vsub.s32 %v1377, %v1379
        %v1381 = vrot.slane %v1367, %v1380
        %v1382 = vcombine.low %v1326, %v1332
        %v1383 = vcombine.high %v1326, %v1332
        %v1385 = vunpack.c.l.s4 1983009808
        %v1386 = vunpack.c.0.s8 %v1385
        %v1387 = vlaneseq
        %v1388 = vshrl.u32 %v1387, 7
        %v1389 = vsub.s32 %v1386, %v1388
        %v1390 = vrot.slane %v1382, %v1389
        %v1392 = vunpack.c.l.s4 1983009808
        %v1393 = vunpack.c.0.s8 %v1392
        %v1394 = vlaneseq
        %v1395 = vshrl.u32 %v1394, 7
        %v1396 = vsub.s32 %v1393, %v1395
        %v1397 = vrot.slane %v1383, %v1396
        %v1398 = vcombine.low %v1342, %v1358
        %v1399 = vcombine.high %v1342, %v1358
        %v1401 = vunpack.c.l.s4 1934713408
        %v1402 = vunpack.c.0.s8 %v1401
        %v1403 = vlaneseq
        %v1404 = vshrl.u32 %v1403, 7
        %v1405 = vsub.s32 %v1402, %v1404
        %v1406 = vrot.slane %v1398, %v1405
        %v1408 = vunpack.c.l.s4 1934713408
        %v1409 = vunpack.c.0.s8 %v1408
        %v1410 = vlaneseq
        %v1411 = vshrl.u32 %v1410, 7
        %v1412 = vsub.s32 %v1409, %v1411
        %v1413 = vrot.slane %v1399, %v1412
        %v1414 = vcombine.low %v1349, %v1365
        %v1415 = vcombine.high %v1349, %v1365
        %v1417 = vunpack.c.l.s4 1934713408
        %v1418 = vunpack.c.0.s8 %v1417
        %v1419 = vlaneseq
        %v1420 = vshrl.u32 %v1419, 7
        %v1421 = vsub.s32 %v1418, %v1420
        %v1422 = vrot.slane %v1414, %v1421
        %v1424 = vunpack.c.l.s4 1934713408
        %v1425 = vunpack.c.0.s8 %v1424
        %v1426 = vlaneseq
        %v1427 = vshrl.u32 %v1426, 7
        %v1428 = vsub.s32 %v1425, %v1427
        %v1429 = vrot.slane %v1415, %v1428
        %v1430 = vcombine.low %v1374, %v1390
        %v1431 = vcombine.high %v1374, %v1390
        %v1433 = vunpack.c.l.s4 1934713408
        %v1434 = vunpack.c.0.s8 %v1433
        %v1435 = vlaneseq
        %v1436 = vshrl.u32 %v1435, 7
        %v1437 = vsub.s32 %v1434, %v1436
        %v1438 = vrot.slane %v1430, %v1437
        %v1440 = vunpack.c.l.s4 1934713408
        %v1441 = vunpack.c.0.s8 %v1440
        %v1442 = vlaneseq
        %v1443 = vshrl.u32 %v1442, 7
        %v1444 = vsub.s32 %v1441, %v1443
        %v1445 = vrot.slane %v1431, %v1444
        %v1446 = vcombine.low %v1381, %v1397
        %v1447 = vcombine.high %v1381, %v1397
        %v1449 = vunpack.c.l.s4 1934713408
        %v1450 = vunpack.c.0.s8 %v1449
        %v1451 = vlaneseq
        %v1452 = vshrl.u32 %v1451, 7
        %v1453 = vsub.s32 %v1450, %v1452
        %v1454 = vrot.slane %v1446, %v1453
        %v1456 = vunpack.c.l.s4 1934713408
        %v1457 = vunpack.c.0.s8 %v1456
        %v1458 = vlaneseq
        %v1459 = vshrl.u32 %v1458, 7
        %v1460 = vsub.s32 %v1457, %v1459
        %v1461 = vrot.slane %v1447, %v1460
        %v1462 = vcombine.low %v1406, %v1438
        %v1463 = vcombine.high %v1406, %v1438
        %v1464 = vcombine.low %v1413, %v1445
        %v1465 = vcombine.high %v1413, %v1445
        %v1466 = vcombine.low %v1422, %v1454
        %v1467 = vcombine.high %v1422, %v1454
        %v1468 = vcombine.low %v1429, %v1461
        %v1469 = vcombine.high %v1429, %v1461
        %v1470 = vadd.f32 %v1202, %v1462
        %v1471 = vadd.f32 %v1203, %v1463
        %v1472 = vadd.f32 %v1204, %v1464
        %v1473 = vadd.f32 %v1205, %v1465
        %v1474 = vadd.f32 %v1206, %v1466
        %v1475 = vadd.f32 %v1207, %v1467
        %v1476 = vadd.f32 %v1208, %v1468
        %v1477 = vadd.f32 %v1209, %v1469
        %1478 = vst.msk [vmem:[%s284] sm:$0xff] %vm603, %v1470
        %1479 = vst.msk [vmem:[%s284 + $0x8] sm:$0xff] %vm603, %v1471
        %1480 = vst.msk [vmem:[%s284 + $0x10] sm:$0xff] %vm603, %v1472
        %1481 = vst.msk [vmem:[%s284 + $0x18] sm:$0xff] %vm603, %v1473
        %1482 = vst.msk [vmem:[%s284 + $0x20] sm:$0xff] %vm603, %v1474
        %1483 = vst.msk [vmem:[%s284 + $0x28] sm:$0xff] %vm603, %v1475
        %1484 = vst.msk [vmem:[%s284 + $0x30] sm:$0xff] %vm603, %v1476
        %1485 = vst.msk [vmem:[%s284 + $0x38] sm:$0xff] %vm603, %v1477
        %s1486 = sand.u32 %s142, 1
        %s1487 = scalar_lea.sflag [#allocation4], %s1486
        %s1488 = sand.u32 %s142, 1
        %s1489 = smul.addr %s1488, 64
        %s1490 = scalar_lea.vmem [#allocation10], %s1489
        // Predicated region
        $region57: #{tpu_custom_call.1} parent=39 // pred_check
          %p1491 = pneg %p152
        $region58: #{tpu_custom_call.1} parent=39 // pred_check_branch
          %1493 = sbr.rel (%p1491) target = $region60
        $region59: #{tpu_custom_call.1} parent=39 // pred_region
          %s1495 = ssub.s32 1024, 1024
          %1496 = vsyncadd %s1487, %s1495
          %s1497 = smul.addr %s24, 8
          %s1498 = smul.addr %s1497, 128
          %s1499 = scalar_lea.hbm %s5, %s1498
          %s1500 = sshll.u32 %s1490, 4
          %s1501 = int_to_ptr.vmem [resolvable:$true] %s1500
          %1506 = dma.vmem_to_hbm [thread:$0]  %s1501, 1024, %s1499, %s1487, 128, 128, 8
        $region60: #{tpu_custom_call.1} parent=39 // pred_fallthru
          _
      $region40: #{tpu_custom_call.1} parent=5 // pred_fallthru
        _
      %p1507 = scmp.le.s32.totalorder 2, %s19
      // Predicated region
      $region61: #{tpu_custom_call.1} parent=5 // pred_check
        %p1508 = pneg %p1507
      $region62: #{tpu_custom_call.1} parent=5 // pred_check_branch
        %1510 = sbr.rel (%p1508) target = $region64
      $region63: #{tpu_custom_call.1} parent=5 // pred_region
        %s1511 = ssub.s32 %s19, 2
        // Predicated region
        $region65: #{tpu_custom_call.1} parent=63 // pred_check
          %p1512 = pneg %p158
        $region66: #{tpu_custom_call.1} parent=63 // pred_check_branch
          %1514 = sbr.rel (%p1512) target = $region68
        $region67: #{tpu_custom_call.1} parent=63 // pred_region
          %s1515 = sand.u32 %s143, 1
          %s1516 = scalar_lea.sflag [#allocation4], %s1515
          %s1517 = sand.u32 %s143, 1
          %s1518 = smul.addr %s1517, 64
          %s1519 = scalar_lea.vmem [#allocation10], %s1518
          %1520 = dma.done %s1516, 1024
        $region68: #{tpu_custom_call.1} parent=63 // pred_fallthru
          _
      $region64: #{tpu_custom_call.1} parent=5 // pred_fallthru
        _
    $region6: #{tpu_custom_call.1} parent=1 // loop_footer
      %s23 = sadd.s32 1, %s19
    $region7: #{tpu_custom_call.1} parent=1 // loop_footer_branch
      %18 = sbr.rel target = $region3
    $region8: #{tpu_custom_call.1} parent=1 // loop_exit
      _
    %1521 = vsyncpa [#allocation3], 1
    %s1522 = scalar_lea.sflag [#allocation3], 1
    %1523 = vsyncpa %s1522, 1
    %1524 = vsyncpa [#allocation6], 1
    %1525 = vsyncpa [#allocation9], 1
    %1526 = vsyncpa [#allocation4], 1
    %s1527 = scalar_lea.sflag [#allocation4], 1
    %1528 = vsyncpa %s1527, 1

</llo_original>
